<compile_context>
chip_gen: v5e
topology: v5e:2x2
jax: 0.10.0
libtpu: 0.0.40
codegen_flags: <defaults>
</compile_context>

<pallas_src>
import functools

import jax
import jax.numpy as jnp
from jax.experimental import pallas as pl
from jax.experimental.pallas import tpu as pltpu

_LANE = 128
_EPS = 1e-5


def _round_up(n, m):
    return ((n + m - 1) // m) * m


# ----------------------------- Pallas kernel --------------------------------

def _make_fused_mlp_kernel(num_layers):
    """Whole forward pass in one kernel; layer loop statically unrolled."""

    def kernel(*args):
        # args: x_ref, (w_i, b_i) * num_layers, w_out, b_out, o_ref
        x_ref = args[0]
        layer_refs = args[1:1 + 2 * num_layers]
        w_out_ref = args[1 + 2 * num_layers]
        b_out_ref = args[2 + 2 * num_layers]
        o_ref = args[3 + 2 * num_layers]

        h = x_ref[...]                                        # [B, Din]
        for i in range(num_layers):                           # unrolled at trace time
            w = layer_refs[2 * i][...]                        # [Din or Hp, Hp]
            b = layer_refs[2 * i + 1][...]                    # [1, Hp]
            y = jnp.dot(h, w, preferred_element_type=jnp.float32) + b
            h = jnp.maximum(y, 0.0)                           # BN folded; Dropout = id
        o_ref[...] = (jnp.dot(h, w_out_ref[...],
                              preferred_element_type=jnp.float32)
                      + b_out_ref[...])                       # [B, Cp] lane-dense store

    return kernel


def _vmem_spec():
    # Small full-extent blocks: everything resident in VMEM, no grid.
    return pl.BlockSpec(memory_space=pltpu.MemorySpace.VMEM)


# ----------------------------- parameter prep (one-time) --------------------

def init_params(key, in_features, hidden_size, num_layers, num_classes):
    """Deterministic parameter init mirroring the PyTorch module's shapes."""
    params = {"layers": []}
    fan_in = in_features
    for _ in range(num_layers):
        key, kw, kb = jax.random.split(key, 3)
        bound = 1.0 / jnp.sqrt(fan_in)
        w = jax.random.uniform(kw, (fan_in, hidden_size), jnp.float32, -bound, bound)
        b = jax.random.uniform(kb, (hidden_size,), jnp.float32, -bound, bound)
        params["layers"].append({
            "w": w, "b": b,
            "gamma": jnp.ones((hidden_size,), jnp.float32),
            "beta": jnp.zeros((hidden_size,), jnp.float32),
            "running_mean": jnp.zeros((hidden_size,), jnp.float32),
            "running_var": jnp.ones((hidden_size,), jnp.float32),
        })
        fan_in = hidden_size
    key, kw, kb = jax.random.split(key, 3)
    bound = 1.0 / jnp.sqrt(fan_in)
    params["out_w"] = jax.random.uniform(kw, (fan_in, num_classes), jnp.float32,
                                         -bound, bound)
    params["out_b"] = jax.random.uniform(kb, (num_classes,), jnp.float32,
                                         -bound, bound)
    return params


def prepare_params(params, eps=_EPS):
    """One-time prep: fold eval-mode BN into W/b and zero-pad lane dims to 128."""
    num_layers = len(params["layers"])
    layer_args = []
    for idx, layer in enumerate(params["layers"]):
        w = layer["w"].astype(jnp.float32)
        b = layer["b"].astype(jnp.float32)
        inv_std = 1.0 / jnp.sqrt(layer["running_var"].astype(jnp.float32) + eps)
        scale = layer["gamma"].astype(jnp.float32) * inv_std
        shift = (layer["beta"].astype(jnp.float32)
                 - layer["running_mean"].astype(jnp.float32) * scale)
        w_f = w * scale[None, :]
        b_f = b * scale + shift

        din, h = w_f.shape
        hp = _round_up(h, _LANE)
        din_p = din if idx == 0 else _round_up(din, _LANE)  # x itself stays unpadded
        w_pad = jnp.zeros((din_p, hp), jnp.float32).at[:din, :h].set(w_f)
        b_pad = jnp.zeros((1, hp), jnp.float32).at[:, :h].set(b_f)
        layer_args.extend([w_pad, b_pad])

    w_out = params["out_w"].astype(jnp.float32)
    b_out = params["out_b"].astype(jnp.float32)
    din, c = w_out.shape
    din_p = _round_up(din, _LANE) if num_layers > 0 else din
    cp = _round_up(c, _LANE)
    w_out_pad = jnp.zeros((din_p, cp), jnp.float32).at[:din, :c].set(w_out)
    b_out_pad = jnp.zeros((1, cp), jnp.float32).at[:, :c].set(b_out)

    return {"layer_args": layer_args,
            "out_args": [w_out_pad, b_out_pad],
            "num_classes": c}


# ----------------------------- forward ---------------------------------------

@functools.partial(jax.jit, static_argnames=("num_classes",))
def baseline_model_forward(x, layer_args, out_args, *, num_classes):
    num_layers = len(layer_args) // 2            # static (pytree structure)
    B = x.shape[0]
    cp = out_args[0].shape[1]
    kernel = _make_fused_mlp_kernel(num_layers)
    n_inputs = 1 + 2 * num_layers + 2

    out_pad = pl.pallas_call(
        kernel,
        out_shape=jax.ShapeDtypeStruct((B, cp), jnp.float32),
        in_specs=[_vmem_spec()] * n_inputs,
        out_specs=_vmem_spec(),
    )(x.astype(jnp.float32), *layer_args, *out_args)

    out = out_pad[:, :num_classes]
    return out.squeeze(-1) if num_classes == 1 else out


# ----------------------------- main -------------------------------------------

if __name__ == "__main__":
    batch = 8
    in_features = 32
    hidden_size = 32
    num_layers = 2
    num_classes = 1

    key = jax.random.PRNGKey(0)
    key, kx = jax.random.split(key)
    x = jax.random.normal(kx, (batch, in_features), jnp.float32)

    params = init_params(key, in_features, hidden_size, num_layers, num_classes)
    prepped = prepare_params(params)                       # one-time prep

    out = baseline_model_forward(x, prepped["layer_args"], prepped["out_args"],
                                 num_classes=num_classes)
    out = jax.block_until_ready(out)

    expected_shape = (batch,) if num_classes == 1 else (batch, num_classes)
    assert out.shape == expected_shape, (out.shape, expected_shape)

    # Pure-JAX reference from the ORIGINAL (unfolded, unpadded) parameters.
    h_ref = x
    for layer in params["layers"]:
        y = h_ref @ layer["w"] + layer["b"]
        y = (y - layer["running_mean"]) / jnp.sqrt(layer["running_var"] + _EPS)
        y = y * layer["gamma"] + layer["beta"]
        h_ref = jnp.maximum(y, 0.0)
    ref = h_ref @ params["out_w"] + params["out_b"]
    ref = ref.squeeze(-1) if num_classes == 1 else ref
    assert jnp.allclose(out, ref, atol=1e-4, rtol=1e-4), (out, ref)

    print("KERNEL_OK")
</pallas_src>

<mosaic_0001>
module attributes {stable_mosaic.version = 11 : i64} {
  func.func @kernel(%arg0: memref<8x32xf32, #tpu.memory_space<vmem>>, %arg1: memref<32x128xf32, #tpu.memory_space<vmem>>, %arg2: memref<1x128xf32, #tpu.memory_space<vmem>>, %arg3: memref<128x128xf32, #tpu.memory_space<vmem>>, %arg4: memref<1x128xf32, #tpu.memory_space<vmem>>, %arg5: memref<128x128xf32, #tpu.memory_space<vmem>>, %arg6: memref<1x128xf32, #tpu.memory_space<vmem>>, %arg7: memref<8x128xf32, #tpu.memory_space<vmem>>) attributes {dimension_semantics = [], scalar_prefetch = 0 : i64, scratch_operands = 0 : i64, tpu.core_type = #tpu.core_type<tc>} {
    %c0 = arith.constant 0 : index
    %c0_0 = arith.constant 0 : index
    %0 = vector.load %arg0[%c0, %c0_0] : memref<8x32xf32, #tpu.memory_space<vmem>>, vector<8x32xf32>
    %c0_1 = arith.constant 0 : index
    %c0_2 = arith.constant 0 : index
    %1 = vector.load %arg1[%c0_1, %c0_2] : memref<32x128xf32, #tpu.memory_space<vmem>>, vector<32x128xf32>
    %c0_3 = arith.constant 0 : index
    %c0_4 = arith.constant 0 : index
    %2 = vector.load %arg2[%c0_3, %c0_4] : memref<1x128xf32, #tpu.memory_space<vmem>>, vector<1x128xf32>
    %cst = arith.constant dense<0.000000e+00> : vector<8x128xf32>
    %3 = tpu.matmul %0, %1, %cst {dimension_numbers = #tpu.dot_dimension_numbers<[1], [0], [0], [1], [0, 0, 1, 1], [], []>} : vector<8x32xf32>, vector<32x128xf32>, vector<8x128xf32> -> vector<8x128xf32>
    %4 = vector.broadcast %2 : vector<1x128xf32> to vector<8x128xf32>
    %5 = arith.addf %3, %4 : vector<8x128xf32>
    %cst_5 = arith.constant 0.000000e+00 : f32
    %6 = vector.broadcast %cst_5 : f32 to vector<8x128xf32>
    %7 = arith.maximumf %5, %6 : vector<8x128xf32>
    %c0_6 = arith.constant 0 : index
    %c0_7 = arith.constant 0 : index
    %8 = vector.load %arg3[%c0_6, %c0_7] : memref<128x128xf32, #tpu.memory_space<vmem>>, vector<128x128xf32>
    %c0_8 = arith.constant 0 : index
    %c0_9 = arith.constant 0 : index
    %9 = vector.load %arg4[%c0_8, %c0_9] : memref<1x128xf32, #tpu.memory_space<vmem>>, vector<1x128xf32>
    %cst_10 = arith.constant dense<0.000000e+00> : vector<8x128xf32>
    %10 = tpu.matmul %7, %8, %cst_10 {dimension_numbers = #tpu.dot_dimension_numbers<[1], [0], [0], [1], [0, 0, 1, 1], [], []>} : vector<8x128xf32>, vector<128x128xf32>, vector<8x128xf32> -> vector<8x128xf32>
    %11 = vector.broadcast %9 : vector<1x128xf32> to vector<8x128xf32>
    %12 = arith.addf %10, %11 : vector<8x128xf32>
    %cst_11 = arith.constant 0.000000e+00 : f32
    %13 = vector.broadcast %cst_11 : f32 to vector<8x128xf32>
    %14 = arith.maximumf %12, %13 : vector<8x128xf32>
    %c0_12 = arith.constant 0 : index
    %c0_13 = arith.constant 0 : index
    %15 = vector.load %arg5[%c0_12, %c0_13] : memref<128x128xf32, #tpu.memory_space<vmem>>, vector<128x128xf32>
    %cst_14 = arith.constant dense<0.000000e+00> : vector<8x128xf32>
    %16 = tpu.matmul %14, %15, %cst_14 {dimension_numbers = #tpu.dot_dimension_numbers<[1], [0], [0], [1], [0, 0, 1, 1], [], []>} : vector<8x128xf32>, vector<128x128xf32>, vector<8x128xf32> -> vector<8x128xf32>
    %c0_15 = arith.constant 0 : index
    %c0_16 = arith.constant 0 : index
    %17 = vector.load %arg6[%c0_15, %c0_16] : memref<1x128xf32, #tpu.memory_space<vmem>>, vector<1x128xf32>
    %18 = vector.broadcast %17 : vector<1x128xf32> to vector<8x128xf32>
    %19 = arith.addf %16, %18 : vector<8x128xf32>
    %c0_17 = arith.constant 0 : index
    %c0_18 = arith.constant 0 : index
    %20 = vector.load %arg7[%c0_17, %c0_18] : memref<8x128xf32, #tpu.memory_space<vmem>>, vector<8x128xf32>
    tpu.vector_store %arg7[%c0_17, %c0_18], %19 {strides = array<i32>} : memref<8x128xf32, #tpu.memory_space<vmem>>, vector<8x128xf32>,
    return
  }
}

</mosaic_0001>

<llo_original>
// kernel: baseline_model_forward.1
$region0: #{baseline_model_forward.1}
  #allocation0 [shape = 'u32[]', space=smem, size = 0x4, offset = 0x4, fixed_abs, tag = 'smem constant byte address 0x4 - core index']
  #allocation1 [shape = 'u32[72,128]{1,0:T(1,128)}', space=vmem, size = 0x9000, scoped, tag = 'internal scratch']
  %s0 = inlined_call_operand.hbm [shape: f32[8,32], index: 0, kind: input, shape index: {}]
  %s1 = inlined_call_operand.hbm [shape: f32[32,128], index: 1, kind: input, shape index: {}]
  %s2 = inlined_call_operand.vmem [shape: f32[1,128], index: 2, kind: input, shape index: {}]
  %s3 = inlined_call_operand.hbm [shape: f32[128,128], index: 3, kind: input, shape index: {}]
  %s4 = inlined_call_operand.vmem [shape: f32[1,128], index: 4, kind: input, shape index: {}]
  %s5 = inlined_call_operand.hbm [shape: f32[128,128], index: 5, kind: input, shape index: {}]
  %s6 = inlined_call_operand.vmem [shape: f32[1,128], index: 6, kind: input, shape index: {}]
  %s7 = inlined_call_operand.vmem [shape: f32[8,128], index: 7, kind: output, shape index: {}]
  %s8 = sld [smem:[#allocation0]]
  $region54: #{baseline_model_forward.1} parent=0
    _
  %s10 = ssub.s32 1, %s8
  %s11 = scalar_select 0, %s10, %s8
  $region1: #{baseline_model_forward.1} parent=0
    #allocation2 [shape = 'u8[4096]{0}', space=vmem, size = 0x1000, scoped, tag = 'input window, operand 0, single buffered']
    #allocation3 [shape = 's32[1]{0}', space=sflag, size = 0x4, scoped, tag = 'scoped memory for baseline_model_forward.1']
    #allocation4 [shape = 'u8[16384]{0}', space=vmem, size = 0x4000, scoped, tag = 'input window, operand 1, single buffered']
    #allocation5 [shape = 's32[1]{0}', space=sflag, size = 0x4, scoped, tag = 'scoped memory for baseline_model_forward.1']
    #allocation6 [shape = 'u8[65536]{0}', space=vmem, size = 0x10000, scoped, tag = 'input window, operand 3, single buffered']
    #allocation7 [shape = 'u8[65536]{0}', space=vmem, size = 0x10000, scoped, tag = 'input window, operand 5, single buffered']
    #allocation8 [shape = 's32[1]{0}', space=sflag, size = 0x4, scoped, tag = 'scoped memory for baseline_model_forward.1']
    %12 = vsyncpa [#allocation3], 0
    %13 = vsyncpa [#allocation5], 0
    %14 = vsyncpa [#allocation8], 0
    // Predicated region
    $region2: #{baseline_model_forward.1} parent=1 // pred_check
      _
    $region3: #{baseline_model_forward.1} parent=1 // pred_check_branch
      %16 = sbr.rel (0) target = $region5
    $region4: #{baseline_model_forward.1} parent=1 // pred_region
      %18 = vsyncadd [#allocation3], 0
      %s20 = sshll.u32 %s0, 4
      %s21 = int_to_ptr.hbm [resolvable:$true] %s20
      %s22 = sshll.u32 [#allocation2], 4
      %s23 = int_to_ptr.vmem [resolvable:$true] %s22
      %25 = dma.hbm_to_vmem [thread:$0]  %s21, 128, %s23, [#allocation3]
    $region5: #{baseline_model_forward.1} parent=1 // pred_fallthru
      _
    // Predicated region
    $region6: #{baseline_model_forward.1} parent=1 // pred_check
      _
    $region7: #{baseline_model_forward.1} parent=1 // pred_check_branch
      %27 = sbr.rel (0) target = $region9
    $region8: #{baseline_model_forward.1} parent=1 // pred_region
      %29 = vsyncadd [#allocation5], 0
      %s30 = sshll.u32 %s1, 4
      %s31 = int_to_ptr.hbm [resolvable:$true] %s30
      %s32 = sshll.u32 [#allocation4], 4
      %s33 = int_to_ptr.vmem [resolvable:$true] %s32
      %38 = dma.hbm_to_vmem [thread:$0]  %s31, 512, %s33, [#allocation5], 128, 128, 8
    $region9: #{baseline_model_forward.1} parent=1 // pred_fallthru
      _
    // Predicated region
    $region10: #{baseline_model_forward.1} parent=1 // pred_check
      _
    $region11: #{baseline_model_forward.1} parent=1 // pred_check_branch
      %40 = sbr.rel (0) target = $region13
    $region12: #{baseline_model_forward.1} parent=1 // pred_region
      _
    $region13: #{baseline_model_forward.1} parent=1 // pred_fallthru
      _
    // Predicated region
    $region14: #{baseline_model_forward.1} parent=1 // pred_check
      _
    $region15: #{baseline_model_forward.1} parent=1 // pred_check_branch
      %42 = sbr.rel (0) target = $region17
    $region16: #{baseline_model_forward.1} parent=1 // pred_region
      %44 = vsyncadd [#allocation5], 0
      %s45 = sshll.u32 %s3, 4
      %s46 = int_to_ptr.hbm [resolvable:$true] %s45
      %s47 = sshll.u32 [#allocation6], 4
      %s48 = int_to_ptr.vmem [resolvable:$true] %s47
      %53 = dma.hbm_to_vmem [thread:$0]  %s46, 2048, %s48, [#allocation5], 128, 128, 8
    $region17: #{baseline_model_forward.1} parent=1 // pred_fallthru
      _
    // Predicated region
    $region18: #{baseline_model_forward.1} parent=1 // pred_check
      _
    $region19: #{baseline_model_forward.1} parent=1 // pred_check_branch
      %55 = sbr.rel (0) target = $region21
    $region20: #{baseline_model_forward.1} parent=1 // pred_region
      _
    $region21: #{baseline_model_forward.1} parent=1 // pred_fallthru
      _
    // Predicated region
    $region22: #{baseline_model_forward.1} parent=1 // pred_check
      _
    $region23: #{baseline_model_forward.1} parent=1 // pred_check_branch
      %57 = sbr.rel (0) target = $region25
    $region24: #{baseline_model_forward.1} parent=1 // pred_region
      %59 = vsyncadd [#allocation8], 0
      %s60 = sshll.u32 %s5, 4
      %s61 = int_to_ptr.hbm [resolvable:$true] %s60
      %s62 = sshll.u32 [#allocation7], 4
      %s63 = int_to_ptr.vmem [resolvable:$true] %s62
      %68 = dma.hbm_to_vmem [thread:$0]  %s61, 2048, %s63, [#allocation8], 128, 128, 8
    $region25: #{baseline_model_forward.1} parent=1 // pred_fallthru
      _
    // Predicated region
    $region26: #{baseline_model_forward.1} parent=1 // pred_check
      _
    $region27: #{baseline_model_forward.1} parent=1 // pred_check_branch
      %70 = sbr.rel (0) target = $region29
    $region28: #{baseline_model_forward.1} parent=1 // pred_region
      _
    $region29: #{baseline_model_forward.1} parent=1 // pred_fallthru
      _
    // Predicated region
    $region30: #{baseline_model_forward.1} parent=1 // pred_check
      _
    $region31: #{baseline_model_forward.1} parent=1 // pred_check_branch
      %72 = sbr.rel (0) target = $region33
    $region32: #{baseline_model_forward.1} parent=1 // pred_region
      %74 = dma.done [#allocation3], 128
    $region33: #{baseline_model_forward.1} parent=1 // pred_fallthru
      _
    // Predicated region
    $region34: #{baseline_model_forward.1} parent=1 // pred_check
      _
    $region35: #{baseline_model_forward.1} parent=1 // pred_check_branch
      %76 = sbr.rel (0) target = $region37
    $region36: #{baseline_model_forward.1} parent=1 // pred_region
      %78 = dma.done [#allocation5], 512
    $region37: #{baseline_model_forward.1} parent=1 // pred_fallthru
      _
    // Predicated region
    $region38: #{baseline_model_forward.1} parent=1 // pred_check
      _
    $region39: #{baseline_model_forward.1} parent=1 // pred_check_branch
      %80 = sbr.rel (0) target = $region41
    $region40: #{baseline_model_forward.1} parent=1 // pred_region
      %82 = dma.done [#allocation5], 2048
    $region41: #{baseline_model_forward.1} parent=1 // pred_fallthru
      _
    // Predicated region
    $region42: #{baseline_model_forward.1} parent=1 // pred_check
      _
    $region43: #{baseline_model_forward.1} parent=1 // pred_check_branch
      %84 = sbr.rel (0) target = $region45
    $region44: #{baseline_model_forward.1} parent=1 // pred_region
      %86 = dma.done [#allocation8], 2048
    $region45: #{baseline_model_forward.1} parent=1 // pred_fallthru
      _
    %v87 = vld [vmem:[#allocation2] sm:$0xff]
    %v88 = vld [vmem:[#allocation4] sm:$0xff]
    %v89 = vld [vmem:[#allocation4 + $0x8] sm:$0xff]
    %v90 = vld [vmem:[#allocation4 + $0x10] sm:$0xff]
    %v91 = vld [vmem:[#allocation4 + $0x18] sm:$0xff]
    %v92 = vld [vmem:[%s2] sm:$0x1]
    %v94 = vperm.slane %v92, 0
    %vm96 = vcmask 261120
    %v98 = vsel %vm96, %v87, 0
    %100 = vmatpush.msra.mxu0 0.0
    %101 = vmatpush.msra.mxu0 0.0
    %102 = vmatpush.msra.mxu0 0.0
    %103 = vmatpush.msra.mxu0 0.0
    %104 = vmatpush.msra.mxu0 0.0
    %105 = vmatpush.msra.mxu0 0.0
    %106 = vmatpush.msra.mxu0 0.0
    %107 = vmatpush.msra.mxu0 0.0
    %108 = vmatpush.msra.mxu0 0.0
    %109 = vmatpush.msra.mxu0 0.0
    %110 = vmatpush.msra.mxu0 0.0
    %111 = vmatpush.msra.mxu0 0.0
    %112 = vmatpush.msra.mxu0 %v91
    %113 = vmatpush.msra.mxu0 %v90
    %114 = vmatpush.msra.mxu0 %v89
    %115 = vmatpush.msra.mxu0 %v88
    %116 = vmatmul.f32.gmra.mxu0 %v98
    %v117 = vpop.f32.mrf.mxu0
    %v118 = vadd.f32 %v94, %v117
    %119 = vdwg.mxu0
    %v120 = vmax.f32 %v118, 0.0
    %v121 = vld [vmem:[#allocation6] sm:$0xff]
    %v122 = vld [vmem:[#allocation6 + $0x8] sm:$0xff]
    %v123 = vld [vmem:[#allocation6 + $0x10] sm:$0xff]
    %v124 = vld [vmem:[#allocation6 + $0x18] sm:$0xff]
    %v125 = vld [vmem:[#allocation6 + $0x20] sm:$0xff]
    %v126 = vld [vmem:[#allocation6 + $0x28] sm:$0xff]
    %v127 = vld [vmem:[#allocation6 + $0x30] sm:$0xff]
    %v128 = vld [vmem:[#allocation6 + $0x38] sm:$0xff]
    %v129 = vld [vmem:[#allocation6 + $0x40] sm:$0xff]
    %v130 = vld [vmem:[#allocation6 + $0x48] sm:$0xff]
    %v131 = vld [vmem:[#allocation6 + $0x50] sm:$0xff]
    %v132 = vld [vmem:[#allocation6 + $0x58] sm:$0xff]
    %v133 = vld [vmem:[#allocation6 + $0x60] sm:$0xff]
    %v134 = vld [vmem:[#allocation6 + $0x68] sm:$0xff]
    %v135 = vld [vmem:[#allocation6 + $0x70] sm:$0xff]
    %v136 = vld [vmem:[#allocation6 + $0x78] sm:$0xff]
    %v137 = vld [vmem:[%s4] sm:$0x1]
    %v139 = vperm.slane %v137, 0
    %141 = vmatpush.msra.mxu0 %v136
    %142 = vmatpush.msra.mxu0 %v135
    %143 = vmatpush.msra.mxu0 %v134
    %144 = vmatpush.msra.mxu0 %v133
    %145 = vmatpush.msra.mxu0 %v132
    %146 = vmatpush.msra.mxu0 %v131
    %147 = vmatpush.msra.mxu0 %v130
    %148 = vmatpush.msra.mxu0 %v129
    %149 = vmatpush.msra.mxu0 %v128
    %150 = vmatpush.msra.mxu0 %v127
    %151 = vmatpush.msra.mxu0 %v126
    %152 = vmatpush.msra.mxu0 %v125
    %153 = vmatpush.msra.mxu0 %v124
    %154 = vmatpush.msra.mxu0 %v123
    %155 = vmatpush.msra.mxu0 %v122
    %156 = vmatpush.msra.mxu0 %v121
    %157 = vmatmul.f32.gmra.mxu0 %v120
    %v158 = vpop.f32.mrf.mxu0
    %v159 = vadd.f32 %v139, %v158
    %160 = vdwg.mxu0
    %v161 = vmax.f32 %v159, 0.0
    %v162 = vld [vmem:[#allocation7] sm:$0xff]
    %v163 = vld [vmem:[#allocation7 + $0x8] sm:$0xff]
    %v164 = vld [vmem:[#allocation7 + $0x10] sm:$0xff]
    %v165 = vld [vmem:[#allocation7 + $0x18] sm:$0xff]
    %v166 = vld [vmem:[#allocation7 + $0x20] sm:$0xff]
    %v167 = vld [vmem:[#allocation7 + $0x28] sm:$0xff]
    %v168 = vld [vmem:[#allocation7 + $0x30] sm:$0xff]
    %v169 = vld [vmem:[#allocation7 + $0x38] sm:$0xff]
    %v170 = vld [vmem:[#allocation7 + $0x40] sm:$0xff]
    %v171 = vld [vmem:[#allocation7 + $0x48] sm:$0xff]
    %v172 = vld [vmem:[#allocation7 + $0x50] sm:$0xff]
    %v173 = vld [vmem:[#allocation7 + $0x58] sm:$0xff]
    %v174 = vld [vmem:[#allocation7 + $0x60] sm:$0xff]
    %v175 = vld [vmem:[#allocation7 + $0x68] sm:$0xff]
    %v176 = vld [vmem:[#allocation7 + $0x70] sm:$0xff]
    %v177 = vld [vmem:[#allocation7 + $0x78] sm:$0xff]
    %v178 = vld [vmem:[%s6] sm:$0x1]
    %v180 = vperm.slane %v178, 0
    %182 = vmatpush.msra.mxu0 %v177
    %183 = vmatpush.msra.mxu0 %v176
    %184 = vmatpush.msra.mxu0 %v175
    %185 = vmatpush.msra.mxu0 %v174
    %186 = vmatpush.msra.mxu0 %v173
    %187 = vmatpush.msra.mxu0 %v172
    %188 = vmatpush.msra.mxu0 %v171
    %189 = vmatpush.msra.mxu0 %v170
    %190 = vmatpush.msra.mxu0 %v169
    %191 = vmatpush.msra.mxu0 %v168
    %192 = vmatpush.msra.mxu0 %v167
    %193 = vmatpush.msra.mxu0 %v166
    %194 = vmatpush.msra.mxu0 %v165
    %195 = vmatpush.msra.mxu0 %v164
    %196 = vmatpush.msra.mxu0 %v163
    %197 = vmatpush.msra.mxu0 %v162
    %198 = vmatmul.f32.gmra.mxu0 %v161
    %v199 = vpop.f32.mrf.mxu0
    %v200 = vadd.f32 %v180, %v199
    %201 = vdwg.mxu0
    %202 = vst [vmem:[%s7] sm:$0xff] %v200
    // Predicated region
    $region46: #{baseline_model_forward.1} parent=1 // pred_check
      _
    $region47: #{baseline_model_forward.1} parent=1 // pred_check_branch
      %204 = sbr.rel (0) target = $region49
    $region48: #{baseline_model_forward.1} parent=1 // pred_region
      _
    $region49: #{baseline_model_forward.1} parent=1 // pred_fallthru
      _
    // Predicated region
    $region50: #{baseline_model_forward.1} parent=1 // pred_check
      _
    $region51: #{baseline_model_forward.1} parent=1 // pred_check_branch
      %206 = sbr.rel (0) target = $region53
    $region52: #{baseline_model_forward.1} parent=1 // pred_region
      _
    $region53: #{baseline_model_forward.1} parent=1 // pred_fallthru
      _
    %207 = vsyncpa [#allocation3], 1
    %208 = vsyncpa [#allocation5], 1
    %209 = vsyncpa [#allocation8], 1

</llo_original>
